<compile_context>
chip_gen: v6e
topology: v6e:2x2x1
jax: 0.10.0
libtpu: 0.0.40
codegen_flags: <defaults>
</compile_context>

<pallas_src>
import functools

import jax
import jax.numpy as jnp
import numpy as np
from jax.experimental import pallas as pl
from jax.experimental.pallas import tpu as pltpu


def _round_up(x, m):
    return (x + m - 1) // m * m


def _order_preserving_kernel(x_ref, s_ref, const_ref, out_ref, *,
                             C, H, r_b1, r_w2, r_b2):
    x = x_ref[...]          # (TB, C) f32  raw logits (invariant=False path)
    s = s_ref[...]          # (TB, C) f32  logits sorted descending per row

    # ---- grid-invariant constants, statically sliced from the packed buffer ----
    w1 = const_ref[0:C, 0:H]                 # (C, H)
    b1 = const_ref[r_b1:r_b1 + 1, 0:H]       # (1, H)
    w2 = const_ref[r_w2:r_w2 + H, 0:C]       # (H, C)
    b2 = const_ref[r_b2:r_b2 + 1, 0:C]       # (1, C)

    # ---- base_model: Linear -> ReLU -> Linear ----
    h = jnp.maximum(jnp.dot(x, w1, preferred_element_type=jnp.float32) + b1, 0.0)
    m = jnp.dot(h, w2, preferred_element_type=jnp.float32) + b2

    # ---- softplus (F.softplus, threshold=20) ----
    # Column 0 of m (which the reference zeroes) is never read below (p <= C-2
    # => column index C-1-p >= 1), so no explicit masking is required.
    sp = jnp.where(m > 20.0, m, jnp.log1p(jnp.exp(jnp.minimum(m, 20.0))))

    # ---- fused diffs + reverse-cumsum + inverse-permutation gather ----
    #   out[b, c] = sum_{p=0}^{C-2} [x[b,c] >= s[b,p]] * (s[b,p]-s[b,p+1]) * sp[b, C-1-p]
    # C is small & static -> unrolled; 4 independent partial accumulators break the
    # serial VPU add chain (tree-summed at the end).
    n_acc = min(4, max(C - 1, 1))
    accs = [jnp.zeros(x.shape, jnp.float32) for _ in range(n_acc)]
    for p in range(C - 1):
        d_col = s[:, p:p + 1] - s[:, p + 1:p + 2]          # (TB, 1)  rank-p diff
        w_col = d_col * sp[:, C - 1 - p:C - p]              # (TB, 1)
        a = p % n_acc
        accs[a] = accs[a] + jnp.where(x >= s[:, p:p + 1], w_col, 0.0)

    while len(accs) > 1:                                     # pairwise tree reduce
        nxt = [accs[i] + accs[i + 1] for i in range(0, len(accs) - 1, 2)]
        if len(accs) % 2:
            nxt.append(accs[-1])
        accs = nxt

    out_ref[...] = accs[0]


def _pack_constants(params):
    """Concatenate w1/b1/w2/b2 into a single 8-row-aligned f32 buffer."""
    w1 = params["w1"].astype(jnp.float32)                    # (C, H)
    b1 = params["b1"].astype(jnp.float32).reshape(1, -1)     # (1, H)
    w2 = params["w2"].astype(jnp.float32)                    # (H, C)
    b2 = params["b2"].astype(jnp.float32).reshape(1, -1)     # (1, C)
    C, H = w1.shape
    W = max(C, H)
    r_b1 = _round_up(C, 8)
    r_w2 = r_b1 + 8
    r_b2 = r_w2 + _round_up(H, 8)
    rows = r_b2 + 8
    buf = jnp.zeros((rows, W), jnp.float32)
    buf = buf.at[0:C, 0:H].set(w1)
    buf = buf.at[r_b1:r_b1 + 1, 0:H].set(b1)
    buf = buf.at[r_w2:r_w2 + H, 0:C].set(w2)
    buf = buf.at[r_b2:r_b2 + 1, 0:C].set(b2)
    return buf, (r_b1, r_w2, r_b2)


@functools.partial(jax.jit, static_argnames=("block_b",))
def order_preserving_forward(logits, labels, params, block_b=None):
    """Forward pass of OrderPreservingModel (invariant=False, residual=False)."""
    B, C = logits.shape
    H = params["w1"].shape[1]
    if block_b is None:
        # Fewest possible grid steps: per-step pipeline overhead (~0.35 us) dwarfs the
        # compute of a tiny tile, so put the whole batch in one tile (grid=(1,)) on
        # every TPU generation (do NOT split for v7x's second core at this size).
        block_b = B
    assert B % block_b == 0

    logits = logits.astype(jnp.float32)
    sorted_logits = -jnp.sort(-logits, axis=-1)              # descending sort (glue)

    packed, (r_b1, r_w2, r_b2) = _pack_constants(params)
    R, W = packed.shape

    kernel = functools.partial(_order_preserving_kernel,
                               C=C, H=H, r_b1=r_b1, r_w2=r_w2, r_b2=r_b2)

    # NOTE: if the grid ever grows past 1 (large B), mark the packed-constant
    # BlockSpec pipeline_mode=pl.Buffered(1) so grid-invariant data isn't
    # double-buffered (matters most on v7x's 64 MiB VMEM).
    out = pl.pallas_call(
        kernel,
        out_shape=jax.ShapeDtypeStruct((B, C), jnp.float32),
        grid_spec=pltpu.PrefetchScalarGridSpec(
            num_scalar_prefetch=0,
            grid=(B // block_b,),
            in_specs=[
                pl.BlockSpec((block_b, C), lambda i: (i, 0)),   # logits
                pl.BlockSpec((block_b, C), lambda i: (i, 0)),   # sorted logits
                pl.BlockSpec((R, W), lambda i: (0, 0)),         # packed constants
            ],
            out_specs=pl.BlockSpec((block_b, C), lambda i: (i, 0)),
        ),
        compiler_params=pltpu.CompilerParams(dimension_semantics=("parallel",)),
    )(logits, sorted_logits, packed)

    # --- loss glue (assumed cross-entropy; see TODO above) ---
    logz = jax.nn.logsumexp(out, axis=-1)
    picked = jnp.take_along_axis(out, labels[:, None], axis=-1)[:, 0]
    loss = jnp.mean(logz - picked)

    return out, loss, None


def _reference_forward(logits, params):
    """Pure-JAX reference of the PyTorch forward (for a sanity check)."""
    logits = logits.astype(jnp.float32)
    sorted_logits = -jnp.sort(-logits, axis=-1)
    sorted_indices = jnp.argsort(-logits, axis=-1)
    unsorted_indices = jnp.argsort(sorted_indices, axis=-1)
    diffs = sorted_logits[:, :-1] - sorted_logits[:, 1:]
    diffs = jnp.concatenate(
        [diffs, jnp.ones((diffs.shape[0], 1), diffs.dtype)], axis=1)
    u = diffs[:, ::-1]
    h = jnp.maximum(logits @ params["w1"] + params["b1"][0], 0.0)
    m = h @ params["w2"] + params["b2"][0]
    m = m.at[:, 1:].set(jax.nn.softplus(m[:, 1:]))
    m = m.at[:, 0].set(0.0)
    um = jnp.cumsum(u * m, axis=1)[:, ::-1]
    return jnp.take_along_axis(um, unsorted_indices, axis=1)


def _init_params(key, num_classes):
    C = num_classes
    H = int(C * 1.5)
    k1, k2, k3, k4 = jax.random.split(key, 4)
    lim1 = 1.0 / np.sqrt(C)
    lim2 = 1.0 / np.sqrt(H)
    return {
        "w1": jax.random.uniform(k1, (C, H), jnp.float32, -lim1, lim1),
        "b1": jax.random.uniform(k2, (1, H), jnp.float32, -lim1, lim1),
        "w2": jax.random.uniform(k3, (H, C), jnp.float32, -lim2, lim2),
        "b2": jax.random.uniform(k4, (1, C), jnp.float32, -lim2, lim2),
    }


if __name__ == "__main__":
    NUM_CLASS = 10       # cfg.MODEL.NUM_CLASS
    BATCH = 16

    key = jax.random.PRNGKey(0)
    k_logits, k_labels, k_params = jax.random.split(key, 3)

    logits = jax.random.normal(k_logits, (BATCH, NUM_CLASS), jnp.float32) * 2.0
    labels = jax.random.randint(k_labels, (BATCH,), 0, NUM_CLASS, jnp.int32)
    params = _init_params(k_params, NUM_CLASS)

    out, loss, softmaxed = order_preserving_forward(logits, labels, params)
    out = jax.block_until_ready(out)
    loss = jax.block_until_ready(loss)

    ref = _reference_forward(logits, params)
    # Tolerance 1e-2: the in-kernel Mosaic matmuls and the XLA reference matmuls may
    # use different default f32 contraction paths on the MXU.
    np.testing.assert_allclose(np.asarray(out), np.asarray(ref), rtol=1e-2, atol=1e-2)

    print("KERNEL_OK")
</pallas_src>

<mosaic_0001>
module attributes {stable_mosaic.version = 11 : i64} {
  func.func @_order_preserving_kernel(%arg0: i32, %arg1: memref<16x10xf32, #tpu.memory_space<vmem>>, %arg2: memref<16x10xf32, #tpu.memory_space<vmem>>, %arg3: memref<48x15xf32, #tpu.memory_space<vmem>>, %arg4: memref<16x10xf32, #tpu.memory_space<vmem>>) attributes {dimension_semantics = [#tpu.dimension_semantics<parallel>], iteration_bounds = array<i64: 1>, scalar_prefetch = 0 : i64, scratch_operands = 0 : i64, tpu.core_type = #tpu.core_type<tc>, window_params = [{transform_indices = @transform_0, window_bounds = array<i64: 16, 10>}, {transform_indices = @transform_1, window_bounds = array<i64: 16, 10>}, {pipeline_mode = #tpu.pipeline_mode<synchronous>, transform_indices = @transform_2, window_bounds = array<i64: 48, 15>}, {transform_indices = @transform_3, window_bounds = array<i64: 16, 10>}]} {
    %c0 = arith.constant 0 : index
    %c0_0 = arith.constant 0 : index
    %0 = vector.load %arg1[%c0, %c0_0] : memref<16x10xf32, #tpu.memory_space<vmem>>, vector<16x10xf32>
    %c0_1 = arith.constant 0 : index
    %c0_2 = arith.constant 0 : index
    %1 = vector.load %arg2[%c0_1, %c0_2] : memref<16x10xf32, #tpu.memory_space<vmem>>, vector<16x10xf32>
    %c0_3 = arith.constant 0 : index
    %c0_4 = arith.constant 0 : index
    %2 = vector.load %arg3[%c0_3, %c0_4] : memref<48x15xf32, #tpu.memory_space<vmem>>, vector<10x15xf32>
    %c16 = arith.constant 16 : index
    %c0_5 = arith.constant 0 : index
    %3 = vector.load %arg3[%c16, %c0_5] : memref<48x15xf32, #tpu.memory_space<vmem>>, vector<1x15xf32>
    %c24 = arith.constant 24 : index
    %c0_6 = arith.constant 0 : index
    %4 = vector.load %arg3[%c24, %c0_6] : memref<48x15xf32, #tpu.memory_space<vmem>>, vector<15x10xf32>
    %c40 = arith.constant 40 : index
    %c0_7 = arith.constant 0 : index
    %5 = vector.load %arg3[%c40, %c0_7] : memref<48x15xf32, #tpu.memory_space<vmem>>, vector<1x10xf32>
    %cst = arith.constant dense<0.000000e+00> : vector<16x15xf32>
    %6 = tpu.matmul %0, %2, %cst {dimension_numbers = #tpu.dot_dimension_numbers<[1], [0], [0], [1], [0, 0, 1, 1], [], []>} : vector<16x10xf32>, vector<10x15xf32>, vector<16x15xf32> -> vector<16x15xf32>
    %7 = vector.broadcast %3 : vector<1x15xf32> to vector<16x15xf32>
    %8 = arith.addf %6, %7 : vector<16x15xf32>
    %cst_8 = arith.constant 0.000000e+00 : f32
    %9 = vector.broadcast %cst_8 : f32 to vector<16x15xf32>
    %10 = arith.maximumf %8, %9 : vector<16x15xf32>
    %cst_9 = arith.constant dense<0.000000e+00> : vector<16x10xf32>
    %11 = tpu.matmul %10, %4, %cst_9 {dimension_numbers = #tpu.dot_dimension_numbers<[1], [0], [0], [1], [0, 0, 1, 1], [], []>} : vector<16x15xf32>, vector<15x10xf32>, vector<16x10xf32> -> vector<16x10xf32>
    %12 = vector.broadcast %5 : vector<1x10xf32> to vector<16x10xf32>
    %13 = arith.addf %11, %12 : vector<16x10xf32>
    %cst_10 = arith.constant 2.000000e+01 : f32
    %14 = vector.broadcast %cst_10 : f32 to vector<16x10xf32>
    %15 = arith.cmpf ogt, %13, %14 : vector<16x10xf32>
    %cst_11 = arith.constant 2.000000e+01 : f32
    %16 = vector.broadcast %cst_11 : f32 to vector<16x10xf32>
    %17 = arith.minimumf %13, %16 : vector<16x10xf32>
    %18 = math.exp %17 : vector<16x10xf32>
    %19 = math.log1p %18 : vector<16x10xf32>
    %20 = arith.select %15, %13, %19 : vector<16x10xi1>, vector<16x10xf32>
    %cst_12 = arith.constant 0.000000e+00 : f32
    %21 = vector.broadcast %cst_12 : f32 to vector<16x10xf32>
    %cst_13 = arith.constant 0.000000e+00 : f32
    %22 = vector.broadcast %cst_13 : f32 to vector<16x10xf32>
    %cst_14 = arith.constant 0.000000e+00 : f32
    %23 = vector.broadcast %cst_14 : f32 to vector<16x10xf32>
    %cst_15 = arith.constant 0.000000e+00 : f32
    %24 = vector.broadcast %cst_15 : f32 to vector<16x10xf32>
    %25 = vector.extract_strided_slice %1 {offsets = [0, 0], sizes = [16, 1], strides = [1, 1]} : vector<16x10xf32> to vector<16x1xf32>
    %26 = vector.extract_strided_slice %1 {offsets = [0, 1], sizes = [16, 1], strides = [1, 1]} : vector<16x10xf32> to vector<16x1xf32>
    %27 = arith.subf %25, %26 : vector<16x1xf32>
    %28 = vector.extract_strided_slice %20 {offsets = [0, 9], sizes = [16, 1], strides = [1, 1]} : vector<16x10xf32> to vector<16x1xf32>
    %29 = arith.mulf %27, %28 : vector<16x1xf32>
    %30 = vector.extract_strided_slice %1 {offsets = [0, 0], sizes = [16, 1], strides = [1, 1]} : vector<16x10xf32> to vector<16x1xf32>
    %31 = vector.broadcast %30 : vector<16x1xf32> to vector<16x10xf32>
    %32 = arith.cmpf oge, %0, %31 : vector<16x10xf32>
    %cst_16 = arith.constant 0.000000e+00 : f32
    %33 = vector.shape_cast %29 : vector<16x1xf32> to vector<16x1xf32>
    %34 = vector.broadcast %33 : vector<16x1xf32> to vector<16x10xf32>
    %35 = vector.broadcast %cst_16 : f32 to vector<16x10xf32>
    %36 = arith.select %32, %34, %35 : vector<16x10xi1>, vector<16x10xf32>
    %37 = arith.addf %21, %36 : vector<16x10xf32>
    %38 = vector.extract_strided_slice %1 {offsets = [0, 1], sizes = [16, 1], strides = [1, 1]} : vector<16x10xf32> to vector<16x1xf32>
    %39 = vector.extract_strided_slice %1 {offsets = [0, 2], sizes = [16, 1], strides = [1, 1]} : vector<16x10xf32> to vector<16x1xf32>
    %40 = arith.subf %38, %39 : vector<16x1xf32>
    %41 = vector.extract_strided_slice %20 {offsets = [0, 8], sizes = [16, 1], strides = [1, 1]} : vector<16x10xf32> to vector<16x1xf32>
    %42 = arith.mulf %40, %41 : vector<16x1xf32>
    %43 = vector.extract_strided_slice %1 {offsets = [0, 1], sizes = [16, 1], strides = [1, 1]} : vector<16x10xf32> to vector<16x1xf32>
    %44 = vector.broadcast %43 : vector<16x1xf32> to vector<16x10xf32>
    %45 = arith.cmpf oge, %0, %44 : vector<16x10xf32>
    %cst_17 = arith.constant 0.000000e+00 : f32
    %46 = vector.shape_cast %42 : vector<16x1xf32> to vector<16x1xf32>
    %47 = vector.broadcast %46 : vector<16x1xf32> to vector<16x10xf32>
    %48 = vector.broadcast %cst_17 : f32 to vector<16x10xf32>
    %49 = arith.select %45, %47, %48 : vector<16x10xi1>, vector<16x10xf32>
    %50 = arith.addf %22, %49 : vector<16x10xf32>
    %51 = vector.extract_strided_slice %1 {offsets = [0, 2], sizes = [16, 1], strides = [1, 1]} : vector<16x10xf32> to vector<16x1xf32>
    %52 = vector.extract_strided_slice %1 {offsets = [0, 3], sizes = [16, 1], strides = [1, 1]} : vector<16x10xf32> to vector<16x1xf32>
    %53 = arith.subf %51, %52 : vector<16x1xf32>
    %54 = vector.extract_strided_slice %20 {offsets = [0, 7], sizes = [16, 1], strides = [1, 1]} : vector<16x10xf32> to vector<16x1xf32>
    %55 = arith.mulf %53, %54 : vector<16x1xf32>
    %56 = vector.extract_strided_slice %1 {offsets = [0, 2], sizes = [16, 1], strides = [1, 1]} : vector<16x10xf32> to vector<16x1xf32>
    %57 = vector.broadcast %56 : vector<16x1xf32> to vector<16x10xf32>
    %58 = arith.cmpf oge, %0, %57 : vector<16x10xf32>
    %cst_18 = arith.constant 0.000000e+00 : f32
    %59 = vector.shape_cast %55 : vector<16x1xf32> to vector<16x1xf32>
    %60 = vector.broadcast %59 : vector<16x1xf32> to vector<16x10xf32>
    %61 = vector.broadcast %cst_18 : f32 to vector<16x10xf32>
    %62 = arith.select %58, %60, %61 : vector<16x10xi1>, vector<16x10xf32>
    %63 = arith.addf %23, %62 : vector<16x10xf32>
    %64 = vector.extract_strided_slice %1 {offsets = [0, 3], sizes = [16, 1], strides = [1, 1]} : vector<16x10xf32> to vector<16x1xf32>
    %65 = vector.extract_strided_slice %1 {offsets = [0, 4], sizes = [16, 1], strides = [1, 1]} : vector<16x10xf32> to vector<16x1xf32>
    %66 = arith.subf %64, %65 : vector<16x1xf32>
    %67 = vector.extract_strided_slice %20 {offsets = [0, 6], sizes = [16, 1], strides = [1, 1]} : vector<16x10xf32> to vector<16x1xf32>
    %68 = arith.mulf %66, %67 : vector<16x1xf32>
    %69 = vector.extract_strided_slice %1 {offsets = [0, 3], sizes = [16, 1], strides = [1, 1]} : vector<16x10xf32> to vector<16x1xf32>
    %70 = vector.broadcast %69 : vector<16x1xf32> to vector<16x10xf32>
    %71 = arith.cmpf oge, %0, %70 : vector<16x10xf32>
    %cst_19 = arith.constant 0.000000e+00 : f32
    %72 = vector.shape_cast %68 : vector<16x1xf32> to vector<16x1xf32>
    %73 = vector.broadcast %72 : vector<16x1xf32> to vector<16x10xf32>
    %74 = vector.broadcast %cst_19 : f32 to vector<16x10xf32>
    %75 = arith.select %71, %73, %74 : vector<16x10xi1>, vector<16x10xf32>
    %76 = arith.addf %24, %75 : vector<16x10xf32>
    %77 = vector.extract_strided_slice %1 {offsets = [0, 4], sizes = [16, 1], strides = [1, 1]} : vector<16x10xf32> to vector<16x1xf32>
    %78 = vector.extract_strided_slice %1 {offsets = [0, 5], sizes = [16, 1], strides = [1, 1]} : vector<16x10xf32> to vector<16x1xf32>
    %79 = arith.subf %77, %78 : vector<16x1xf32>
    %80 = vector.extract_strided_slice %20 {offsets = [0, 5], sizes = [16, 1], strides = [1, 1]} : vector<16x10xf32> to vector<16x1xf32>
    %81 = arith.mulf %79, %80 : vector<16x1xf32>
    %82 = vector.extract_strided_slice %1 {offsets = [0, 4], sizes = [16, 1], strides = [1, 1]} : vector<16x10xf32> to vector<16x1xf32>
    %83 = vector.broadcast %82 : vector<16x1xf32> to vector<16x10xf32>
    %84 = arith.cmpf oge, %0, %83 : vector<16x10xf32>
    %cst_20 = arith.constant 0.000000e+00 : f32
    %85 = vector.shape_cast %81 : vector<16x1xf32> to vector<16x1xf32>
    %86 = vector.broadcast %85 : vector<16x1xf32> to vector<16x10xf32>
    %87 = vector.broadcast %cst_20 : f32 to vector<16x10xf32>
    %88 = arith.select %84, %86, %87 : vector<16x10xi1>, vector<16x10xf32>
    %89 = arith.addf %37, %88 : vector<16x10xf32>
    %90 = vector.extract_strided_slice %1 {offsets = [0, 5], sizes = [16, 1], strides = [1, 1]} : vector<16x10xf32> to vector<16x1xf32>
    %91 = vector.extract_strided_slice %1 {offsets = [0, 6], sizes = [16, 1], strides = [1, 1]} : vector<16x10xf32> to vector<16x1xf32>
    %92 = arith.subf %90, %91 : vector<16x1xf32>
    %93 = vector.extract_strided_slice %20 {offsets = [0, 4], sizes = [16, 1], strides = [1, 1]} : vector<16x10xf32> to vector<16x1xf32>
    %94 = arith.mulf %92, %93 : vector<16x1xf32>
    %95 = vector.extract_strided_slice %1 {offsets = [0, 5], sizes = [16, 1], strides = [1, 1]} : vector<16x10xf32> to vector<16x1xf32>
    %96 = vector.broadcast %95 : vector<16x1xf32> to vector<16x10xf32>
    %97 = arith.cmpf oge, %0, %96 : vector<16x10xf32>
    %cst_21 = arith.constant 0.000000e+00 : f32
    %98 = vector.shape_cast %94 : vector<16x1xf32> to vector<16x1xf32>
    %99 = vector.broadcast %98 : vector<16x1xf32> to vector<16x10xf32>
    %100 = vector.broadcast %cst_21 : f32 to vector<16x10xf32>
    %101 = arith.select %97, %99, %100 : vector<16x10xi1>, vector<16x10xf32>
    %102 = arith.addf %50, %101 : vector<16x10xf32>
    %103 = vector.extract_strided_slice %1 {offsets = [0, 6], sizes = [16, 1], strides = [1, 1]} : vector<16x10xf32> to vector<16x1xf32>
    %104 = vector.extract_strided_slice %1 {offsets = [0, 7], sizes = [16, 1], strides = [1, 1]} : vector<16x10xf32> to vector<16x1xf32>
    %105 = arith.subf %103, %104 : vector<16x1xf32>
    %106 = vector.extract_strided_slice %20 {offsets = [0, 3], sizes = [16, 1], strides = [1, 1]} : vector<16x10xf32> to vector<16x1xf32>
    %107 = arith.mulf %105, %106 : vector<16x1xf32>
    %108 = vector.extract_strided_slice %1 {offsets = [0, 6], sizes = [16, 1], strides = [1, 1]} : vector<16x10xf32> to vector<16x1xf32>
    %109 = vector.broadcast %108 : vector<16x1xf32> to vector<16x10xf32>
    %110 = arith.cmpf oge, %0, %109 : vector<16x10xf32>
    %cst_22 = arith.constant 0.000000e+00 : f32
    %111 = vector.shape_cast %107 : vector<16x1xf32> to vector<16x1xf32>
    %112 = vector.broadcast %111 : vector<16x1xf32> to vector<16x10xf32>
    %113 = vector.broadcast %cst_22 : f32 to vector<16x10xf32>
    %114 = arith.select %110, %112, %113 : vector<16x10xi1>, vector<16x10xf32>
    %115 = arith.addf %63, %114 : vector<16x10xf32>
    %116 = vector.extract_strided_slice %1 {offsets = [0, 7], sizes = [16, 1], strides = [1, 1]} : vector<16x10xf32> to vector<16x1xf32>
    %117 = vector.extract_strided_slice %1 {offsets = [0, 8], sizes = [16, 1], strides = [1, 1]} : vector<16x10xf32> to vector<16x1xf32>
    %118 = arith.subf %116, %117 : vector<16x1xf32>
    %119 = vector.extract_strided_slice %20 {offsets = [0, 2], sizes = [16, 1], strides = [1, 1]} : vector<16x10xf32> to vector<16x1xf32>
    %120 = arith.mulf %118, %119 : vector<16x1xf32>
    %121 = vector.extract_strided_slice %1 {offsets = [0, 7], sizes = [16, 1], strides = [1, 1]} : vector<16x10xf32> to vector<16x1xf32>
    %122 = vector.broadcast %121 : vector<16x1xf32> to vector<16x10xf32>
    %123 = arith.cmpf oge, %0, %122 : vector<16x10xf32>
    %cst_23 = arith.constant 0.000000e+00 : f32
    %124 = vector.shape_cast %120 : vector<16x1xf32> to vector<16x1xf32>
    %125 = vector.broadcast %124 : vector<16x1xf32> to vector<16x10xf32>
    %126 = vector.broadcast %cst_23 : f32 to vector<16x10xf32>
    %127 = arith.select %123, %125, %126 : vector<16x10xi1>, vector<16x10xf32>
    %128 = arith.addf %76, %127 : vector<16x10xf32>
    %129 = vector.extract_strided_slice %1 {offsets = [0, 8], sizes = [16, 1], strides = [1, 1]} : vector<16x10xf32> to vector<16x1xf32>
    %130 = vector.extract_strided_slice %1 {offsets = [0, 9], sizes = [16, 1], strides = [1, 1]} : vector<16x10xf32> to vector<16x1xf32>
    %131 = arith.subf %129, %130 : vector<16x1xf32>
    %132 = vector.extract_strided_slice %20 {offsets = [0, 1], sizes = [16, 1], strides = [1, 1]} : vector<16x10xf32> to vector<16x1xf32>
    %133 = arith.mulf %131, %132 : vector<16x1xf32>
    %134 = vector.extract_strided_slice %1 {offsets = [0, 8], sizes = [16, 1], strides = [1, 1]} : vector<16x10xf32> to vector<16x1xf32>
    %135 = vector.broadcast %134 : vector<16x1xf32> to vector<16x10xf32>
    %136 = arith.cmpf oge, %0, %135 : vector<16x10xf32>
    %cst_24 = arith.constant 0.000000e+00 : f32
    %137 = vector.shape_cast %133 : vector<16x1xf32> to vector<16x1xf32>
    %138 = vector.broadcast %137 : vector<16x1xf32> to vector<16x10xf32>
    %139 = vector.broadcast %cst_24 : f32 to vector<16x10xf32>
    %140 = arith.select %136, %138, %139 : vector<16x10xi1>, vector<16x10xf32>
    %141 = arith.addf %89, %140 : vector<16x10xf32>
    %142 = arith.addf %141, %102 : vector<16x10xf32>
    %143 = arith.addf %115, %128 : vector<16x10xf32>
    %144 = arith.addf %142, %143 : vector<16x10xf32>
    %c0_25 = arith.constant 0 : index
    %c0_26 = arith.constant 0 : index
    %145 = vector.load %arg4[%c0_25, %c0_26] : memref<16x10xf32, #tpu.memory_space<vmem>>, vector<16x10xf32>
    tpu.vector_store %arg4[%c0_25, %c0_26], %144 {strides = array<i32>} : memref<16x10xf32, #tpu.memory_space<vmem>>, vector<16x10xf32>,
    return
  }
  func.func @transform_0(%arg0: i32) -> (i32, i32) {
    %c0_i32 = arith.constant 0 : i32
    %c0_i32_0 = arith.constant 0 : i32
    return %arg0, %c0_i32 : i32, i32
  }
  func.func @transform_1(%arg0: i32) -> (i32, i32) {
    %c0_i32 = arith.constant 0 : i32
    %c0_i32_0 = arith.constant 0 : i32
    return %arg0, %c0_i32 : i32, i32
  }
  func.func @transform_2(%arg0: i32) -> (i32, i32) {
    %c0_i32 = arith.constant 0 : i32
    %c0_i32_0 = arith.constant 0 : i32
    %c0_i32_1 = arith.constant 0 : i32
    return %c0_i32, %c0_i32_0 : i32, i32
  }
  func.func @transform_3(%arg0: i32) -> (i32, i32) {
    %c0_i32 = arith.constant 0 : i32
    %c0_i32_0 = arith.constant 0 : i32
    return %arg0, %c0_i32 : i32, i32
  }
}

</mosaic_0001>

<llo_original>
// kernel: neg.2
$region0: #{neg.2}
  #allocation0 [shape = 's32[1]{0}', space=sflag, size = 0x4, scoped, tag = 'scoped memory for neg.2']
  %s0 = inlined_call_operand.vmem [shape: f32[16,10], index: 0, kind: input, shape index: {}]
  %s1 = inlined_call_operand.vmem [shape: f32[16,10], index: 1, kind: output, shape index: {}]
  %v2 = vld [vmem:[%s0] sm:$0xff]
  %3 = xla_tuple %v2
  %4 = xla_tuple %3
  %v5 = vxor.u32 %v2, 2147483648
  %6 = xla_tuple %v5
  %7 = vst [vmem:[%s1] sm:$0xff] %v5
  %s8 = scalar_lea.vmem %s0, 8
  %v9 = vld [vmem:[%s8] sm:$0xff]
  %10 = xla_tuple %v9
  %11 = xla_tuple %10
  %v12 = vxor.u32 %v9, 2147483648
  %13 = xla_tuple %v12
  %s14 = scalar_lea.vmem %s1, 8
  %15 = vst [vmem:[%s14] sm:$0xff] %v12

// kernel: neg.3
$region0: #{neg.3}
  #allocation0 [shape = 's32[1]{0}', space=sflag, size = 0x4, scoped, tag = 'scoped memory for neg.3']
  %s0 = inlined_call_operand.vmem [shape: f32[16,10], index: 0, kind: input, shape index: {}]
  %s1 = inlined_call_operand.vmem [shape: f32[16,10], index: 1, kind: output, shape index: {}]
  %v2 = vld [vmem:[%s0] sm:$0xff]
  %3 = xla_tuple %v2
  %4 = xla_tuple %3
  %v5 = vxor.u32 %v2, 2147483648
  %6 = xla_tuple %v5
  %7 = vst [vmem:[%s1] sm:$0xff] %v5
  %s8 = scalar_lea.vmem %s0, 8
  %v9 = vld [vmem:[%s8] sm:$0xff]
  %10 = xla_tuple %v9
  %11 = xla_tuple %10
  %v12 = vxor.u32 %v9, 2147483648
  %13 = xla_tuple %v12
  %s14 = scalar_lea.vmem %s1, 8
  %15 = vst [vmem:[%s14] sm:$0xff] %v12

// kernel: order_preserving_forward.1
$region0: #{order_preserving_forward.1}
  #allocation0 [shape = 'u32[]', space=smem, size = 0x4, offset = 0x4, fixed_abs, tag = 'smem constant byte address 0x4 - core index']
  #allocation1 [shape = 'u32[144,128]{1,0:T(1,128)}', space=vmem, size = 0x12000, scoped, tag = 'internal scratch']
  %s0 = inlined_call_operand.vmem [shape: f32[16,10], index: 0, kind: input, shape index: {}]
  %s1 = inlined_call_operand.vmem [shape: f32[16,10], index: 1, kind: input, shape index: {}]
  %s2 = inlined_call_operand.vmem [shape: f32[48,15], index: 2, kind: input, shape index: {}]
  %s3 = inlined_call_operand.vmem [shape: f32[16,10], index: 3, kind: output, shape index: {}]
  %s4 = sld [smem:[#allocation0]]
  $region22: #{order_preserving_forward.1} parent=0
    _
  %s6 = ssub.s32 1, %s4
  %s7 = scalar_select 0, %s6, %s4
  // Predicated region
  $region2: #{order_preserving_forward.1} parent=0 // pred_check
    _
  $region3: #{order_preserving_forward.1} parent=0 // pred_check_branch
    %9 = sbr.rel (0) target = $region5
  $region4: #{order_preserving_forward.1} parent=0 // pred_region
    _
  $region5: #{order_preserving_forward.1} parent=0 // pred_fallthru
    _
  // Predicated region
  $region6: #{order_preserving_forward.1} parent=0 // pred_check
    _
  $region7: #{order_preserving_forward.1} parent=0 // pred_check_branch
    %11 = sbr.rel (0) target = $region9
  $region8: #{order_preserving_forward.1} parent=0 // pred_region
    _
  $region9: #{order_preserving_forward.1} parent=0 // pred_fallthru
    _
  // Predicated region
  $region10: #{order_preserving_forward.1} parent=0 // pred_check
    _
  $region11: #{order_preserving_forward.1} parent=0 // pred_check_branch
    %13 = sbr.rel (0) target = $region13
  $region12: #{order_preserving_forward.1} parent=0 // pred_region
    _
  $region13: #{order_preserving_forward.1} parent=0 // pred_fallthru
    _
  %v14 = vld [vmem:[%s0] sm:$0xff]
  %v15 = vld [vmem:[%s0 + $0x8] sm:$0xff]
  %v16 = vld [vmem:[%s1] sm:$0xff]
  %v17 = vld [vmem:[%s1 + $0x8] sm:$0xff]
  %v18 = vld [vmem:[%s2] sm:$0xff]
  %v19 = vld [vmem:[%s2 + $0x8] sm:$0x3]
  %v20 = vld [vmem:[%s2 + $0x10] sm:$0x1]
  %v21 = vld [vmem:[%s2 + $0x18] sm:$0xff]
  %v22 = vld [vmem:[%s2 + $0x20] sm:$0x7f]
  %v23 = vld [vmem:[%s2 + $0x28] sm:$0x1]
  %v24 = vlaneseq
  %v25 = vshrl.u32 %v24, 7
  %v26 = vsub.s32 0, %v25
  %v27 = vrot.slane %v20, %v26
  %vm28 = vcmask 80896
  %v30 = vsel %vm28, %v14, 0
  %v33 = vsel %vm28, %v15, 0
  %vm35 = vcmask 1041408
  %v37 = vsel %vm35, %v19, 0
  %39 = vmatprep.subr.mxu0 0.0
  %40 = vmatpush1.msra.mxu0 0.0
  %41 = vmatprep.subr.mxu0 0.0
  %42 = vmatpush1.msra.mxu0 0.0
  %43 = vmatprep.subr.mxu0 0.0
  %44 = vmatpush1.msra.mxu0 0.0
  %45 = vmatprep.subr.mxu0 0.0
  %46 = vmatpush1.msra.mxu0 0.0
  %47 = vmatprep.subr.mxu0 0.0
  %48 = vmatpush1.msra.mxu0 0.0
  %49 = vmatprep.subr.mxu0 0.0
  %50 = vmatpush1.msra.mxu0 0.0
  %51 = vmatprep.subr.mxu0 0.0
  %52 = vmatpush1.msra.mxu0 0.0
  %53 = vmatprep.subr.mxu0 0.0
  %54 = vmatpush1.msra.mxu0 0.0
  %55 = vmatprep.subr.mxu0 0.0
  %56 = vmatpush1.msra.mxu0 0.0
  %57 = vmatprep.subr.mxu0 0.0
  %58 = vmatpush1.msra.mxu0 0.0
  %59 = vmatprep.subr.mxu0 0.0
  %60 = vmatpush1.msra.mxu0 0.0
  %61 = vmatprep.subr.mxu0 0.0
  %62 = vmatpush1.msra.mxu0 0.0
  %63 = vmatprep.subr.mxu0 0.0
  %64 = vmatpush1.msra.mxu0 0.0
  %65 = vmatprep.subr.mxu0 0.0
  %66 = vmatpush1.msra.mxu0 0.0
  %67 = vmatprep.subr.mxu0 0.0
  %68 = vmatpush1.msra.mxu0 %v37
  %69 = vmatprep.subr.mxu0 0.0
  %70 = vmatpush1.msra.mxu0 %v18
  %71 = vmatprep.subr.mxu0 0.0
  %72 = vmatpush2.msra.mxu0 0.0
  %73 = vmatprep.subr.mxu0 0.0
  %74 = vmatpush2.msra.mxu0 0.0
  %75 = vmatprep.subr.mxu0 0.0
  %76 = vmatpush2.msra.mxu0 0.0
  %77 = vmatprep.subr.mxu0 0.0
  %78 = vmatpush2.msra.mxu0 0.0
  %79 = vmatprep.subr.mxu0 0.0
  %80 = vmatpush2.msra.mxu0 0.0
  %81 = vmatprep.subr.mxu0 0.0
  %82 = vmatpush2.msra.mxu0 0.0
  %83 = vmatprep.subr.mxu0 0.0
  %84 = vmatpush2.msra.mxu0 0.0
  %85 = vmatprep.subr.mxu0 0.0
  %86 = vmatpush2.msra.mxu0 0.0
  %87 = vmatprep.subr.mxu0 0.0
  %88 = vmatpush2.msra.mxu0 0.0
  %89 = vmatprep.subr.mxu0 0.0
  %90 = vmatpush2.msra.mxu0 0.0
  %91 = vmatprep.subr.mxu0 0.0
  %92 = vmatpush2.msra.mxu0 0.0
  %93 = vmatprep.subr.mxu0 0.0
  %94 = vmatpush2.msra.mxu0 0.0
  %95 = vmatprep.subr.mxu0 0.0
  %96 = vmatpush2.msra.mxu0 0.0
  %97 = vmatprep.subr.mxu0 0.0
  %98 = vmatpush2.msra.mxu0 0.0
  %99 = vmatprep.subr.mxu0 0.0
  %100 = vmatpush2.msra.mxu0 0.0
  %101 = vmatprep.subr.mxu0 0.0
  %102 = vmatpush2.msra.mxu0 0.0
  %103 = vmatprep.mubr.f32.mxu0 0.0
  %104 = vmatmul.mubr.f32.gmra.mxu0 %v30
  %v105 = vpop.f32.mrf.mxu0
  %v106 = vadd.f32 %v27, %v105
  %v107 = vpop.f32.mrf.mxu0
  %108 = vmatprep.mubr.f32.mxu0 0.0
  %109 = vmatmul.mubr.f32.gmra.mxu0 %v33
  %v110 = vpop.f32.mrf.mxu0
  %v111 = vadd.f32 %v27, %v110
  %v112 = vpop.f32.mrf.mxu0
  %113 = vdwg.mxu0
  %v114 = vmax.f32 %v106, 0.0
  %v115 = vmax.f32 %v111, 0.0
  %v116 = vlaneseq
  %v117 = vshrl.u32 %v116, 7
  %v118 = vsub.s32 0, %v117
  %v119 = vrot.slane %v23, %v118
  %vm120 = vcmask 121856
  %v122 = vsel %vm120, %v114, 0
  %v125 = vsel %vm120, %v115, 0
  %vm127 = vcmask 1046528
  %v129 = vsel %vm127, %v22, 0
  %131 = vmatprep.subr.mxu0 0.0
  %132 = vmatpush1.msra.mxu0 0.0
  %133 = vmatprep.subr.mxu0 0.0
  %134 = vmatpush1.msra.mxu0 0.0
  %135 = vmatprep.subr.mxu0 0.0
  %136 = vmatpush1.msra.mxu0 0.0
  %137 = vmatprep.subr.mxu0 0.0
  %138 = vmatpush1.msra.mxu0 0.0
  %139 = vmatprep.subr.mxu0 0.0
  %140 = vmatpush1.msra.mxu0 0.0
  %141 = vmatprep.subr.mxu0 0.0
  %142 = vmatpush1.msra.mxu0 0.0
  %143 = vmatprep.subr.mxu0 0.0
  %144 = vmatpush1.msra.mxu0 0.0
  %145 = vmatprep.subr.mxu0 0.0
  %146 = vmatpush1.msra.mxu0 0.0
  %147 = vmatprep.subr.mxu0 0.0
  %148 = vmatpush1.msra.mxu0 0.0
  %149 = vmatprep.subr.mxu0 0.0
  %150 = vmatpush1.msra.mxu0 0.0
  %151 = vmatprep.subr.mxu0 0.0
  %152 = vmatpush1.msra.mxu0 0.0
  %153 = vmatprep.subr.mxu0 0.0
  %154 = vmatpush1.msra.mxu0 0.0
  %155 = vmatprep.subr.mxu0 0.0
  %156 = vmatpush1.msra.mxu0 0.0
  %157 = vmatprep.subr.mxu0 0.0
  %158 = vmatpush1.msra.mxu0 0.0
  %159 = vmatprep.subr.mxu0 0.0
  %160 = vmatpush1.msra.mxu0 %v129
  %161 = vmatprep.subr.mxu0 0.0
  %162 = vmatpush1.msra.mxu0 %v21
  %163 = vmatprep.subr.mxu0 0.0
  %164 = vmatpush2.msra.mxu0 0.0
  %165 = vmatprep.subr.mxu0 0.0
  %166 = vmatpush2.msra.mxu0 0.0
  %167 = vmatprep.subr.mxu0 0.0
  %168 = vmatpush2.msra.mxu0 0.0
  %169 = vmatprep.subr.mxu0 0.0
  %170 = vmatpush2.msra.mxu0 0.0
  %171 = vmatprep.subr.mxu0 0.0
  %172 = vmatpush2.msra.mxu0 0.0
  %173 = vmatprep.subr.mxu0 0.0
  %174 = vmatpush2.msra.mxu0 0.0
  %175 = vmatprep.subr.mxu0 0.0
  %176 = vmatpush2.msra.mxu0 0.0
  %177 = vmatprep.subr.mxu0 0.0
  %178 = vmatpush2.msra.mxu0 0.0
  %179 = vmatprep.subr.mxu0 0.0
  %180 = vmatpush2.msra.mxu0 0.0
  %181 = vmatprep.subr.mxu0 0.0
  %182 = vmatpush2.msra.mxu0 0.0
  %183 = vmatprep.subr.mxu0 0.0
  %184 = vmatpush2.msra.mxu0 0.0
  %185 = vmatprep.subr.mxu0 0.0
  %186 = vmatpush2.msra.mxu0 0.0
  %187 = vmatprep.subr.mxu0 0.0
  %188 = vmatpush2.msra.mxu0 0.0
  %189 = vmatprep.subr.mxu0 0.0
  %190 = vmatpush2.msra.mxu0 0.0
  %191 = vmatprep.subr.mxu0 0.0
  %192 = vmatpush2.msra.mxu0 0.0
  %193 = vmatprep.subr.mxu0 0.0
  %194 = vmatpush2.msra.mxu0 0.0
  %195 = vmatprep.mubr.f32.mxu0 0.0
  %196 = vmatmul.mubr.f32.gmra.mxu0 %v122
  %v197 = vpop.f32.mrf.mxu0
  %v198 = vadd.f32 %v119, %v197
  %v199 = vpop.f32.mrf.mxu0
  %200 = vmatprep.mubr.f32.mxu0 0.0
  %201 = vmatmul.mubr.f32.gmra.mxu0 %v125
  %v202 = vpop.f32.mrf.mxu0
  %v203 = vadd.f32 %v119, %v202
  %v204 = vpop.f32.mrf.mxu0
  %205 = vdwg.mxu0
  %vm206 = vcmp.gt.f32.partialorder %v198, 20.0
  %vm207 = vcmp.gt.f32.partialorder %v203, 20.0
  %v208 = vmin.f32 %v198, 20.0
  %v209 = vmin.f32 %v203, 20.0
  %v210 = vmul.f32 %v208, 1.442695
  %v211 = vpow.pop %v210
  %v212 = vmul.f32 %v209, 1.442695
  %v213 = vpow.pop %v212
  %v214 = vadd.f32 %v211, 1.0
  %v215 = vlog2.pop %v214
  %v216 = vmul.f32 %v215, 0.6931472
  %v217 = vmul.f32 -0.5, %v211
  %v218 = vadd.f32 %v217, 1.0
  %v219 = vmul.f32 %v218, %v211
  %v220 = vand.u32 2147483647, %v211
  %vm221 = vcmp.lt.f32.partialorder %v220, 0.0004427343
  %v222 = vsel %vm221, %v219, %v216
  %v223 = vadd.f32 %v213, 1.0
  %v224 = vlog2.pop %v223
  %v225 = vmul.f32 %v224, 0.6931472
  %v226 = vmul.f32 -0.5, %v213
  %v227 = vadd.f32 %v226, 1.0
  %v228 = vmul.f32 %v227, %v213
  %v229 = vand.u32 2147483647, %v213
  %vm230 = vcmp.lt.f32.partialorder %v229, 0.0004427343
  %v231 = vsel %vm230, %v228, %v225
  %v232 = vsel %vm206, %v198, %v222
  %v233 = vsel %vm207, %v203, %v231
  %236 = vrot.lane.b32.xlu0 %v16, 127
  %v237 = vpop.permute.xlu0 %236
  %238 = vrot.lane.b32.xlu0 %v17, 127
  %v239 = vpop.permute.xlu0 %238
  %v242 = vsub.f32 %v16, %v237
  %v243 = vsub.f32 %v17, %v239
  %246 = vrot.lane.b32.xlu0 %v232, 119
  %v247 = vpop.permute.xlu0 %246
  %248 = vrot.lane.b32.xlu0 %v233, 119
  %v249 = vpop.permute.xlu0 %248
  %v252 = vmul.f32 %v242, %v247
  %v253 = vmul.f32 %v243, %v249
  %254 = vset.pattern.permute.xlu0 0
  %255 = vperm.xlu0 %254, %v16
  %v256 = vpop.permute.xlu0 %255
  %258 = vset.pattern.permute.xlu0 0
  %259 = vperm.xlu0 %258, %v17
  %v260 = vpop.permute.xlu0 %259
  %vm262 = vcmp.ge.f32.partialorder %v14, %v256
  %vm263 = vcmp.ge.f32.partialorder %v15, %v260
  %265 = vset.pattern.permute.xlu0 0
  %266 = vperm.xlu0 %265, %v252
  %v267 = vpop.permute.xlu0 %266
  %270 = vset.pattern.permute.xlu0 0
  %271 = vperm.xlu0 %270, %v253
  %v272 = vpop.permute.xlu0 %271
  %v274 = vsel %vm262, %v267, 0.0
  %v275 = vsel %vm263, %v272, 0.0
  %v276 = vadd.f32 %v274, 0.0
  %v277 = vadd.f32 %v275, 0.0
  %278 = vrot.lane.b32.xlu0 %v232, 121
  %v279 = vpop.permute.xlu0 %278
  %280 = vrot.lane.b32.xlu0 %v233, 121
  %v281 = vpop.permute.xlu0 %280
  %v284 = vmul.f32 %v242, %v279
  %v285 = vmul.f32 %v243, %v281
  %286 = vset.pattern.permute.xlu0 1
  %287 = vperm.xlu0 %286, %v16
  %v288 = vpop.permute.xlu0 %287
  %290 = vset.pattern.permute.xlu0 1
  %291 = vperm.xlu0 %290, %v17
  %v292 = vpop.permute.xlu0 %291
  %vm294 = vcmp.ge.f32.partialorder %v14, %v288
  %vm295 = vcmp.ge.f32.partialorder %v15, %v292
  %297 = vset.pattern.permute.xlu0 1
  %298 = vperm.xlu0 %297, %v284
  %v299 = vpop.permute.xlu0 %298
  %302 = vset.pattern.permute.xlu0 1
  %303 = vperm.xlu0 %302, %v285
  %v304 = vpop.permute.xlu0 %303
  %v306 = vsel %vm294, %v299, 0.0
  %v307 = vsel %vm295, %v304, 0.0
  %v308 = vadd.f32 %v306, 0.0
  %v309 = vadd.f32 %v307, 0.0
  %310 = vrot.lane.b32.xlu0 %v232, 123
  %v311 = vpop.permute.xlu0 %310
  %312 = vrot.lane.b32.xlu0 %v233, 123
  %v313 = vpop.permute.xlu0 %312
  %v316 = vmul.f32 %v242, %v311
  %v317 = vmul.f32 %v243, %v313
  %318 = vset.pattern.permute.xlu0 2
  %319 = vperm.xlu0 %318, %v16
  %v320 = vpop.permute.xlu0 %319
  %322 = vset.pattern.permute.xlu0 2
  %323 = vperm.xlu0 %322, %v17
  %v324 = vpop.permute.xlu0 %323
  %vm326 = vcmp.ge.f32.partialorder %v14, %v320
  %vm327 = vcmp.ge.f32.partialorder %v15, %v324
  %329 = vset.pattern.permute.xlu0 2
  %330 = vperm.xlu0 %329, %v316
  %v331 = vpop.permute.xlu0 %330
  %334 = vset.pattern.permute.xlu0 2
  %335 = vperm.xlu0 %334, %v317
  %v336 = vpop.permute.xlu0 %335
  %v338 = vsel %vm326, %v331, 0.0
  %v339 = vsel %vm327, %v336, 0.0
  %v340 = vadd.f32 %v338, 0.0
  %v341 = vadd.f32 %v339, 0.0
  %342 = vrot.lane.b32.xlu0 %v232, 125
  %v343 = vpop.permute.xlu0 %342
  %344 = vrot.lane.b32.xlu0 %v233, 125
  %v345 = vpop.permute.xlu0 %344
  %v348 = vmul.f32 %v242, %v343
  %v349 = vmul.f32 %v243, %v345
  %350 = vset.pattern.permute.xlu0 3
  %351 = vperm.xlu0 %350, %v16
  %v352 = vpop.permute.xlu0 %351
  %354 = vset.pattern.permute.xlu0 3
  %355 = vperm.xlu0 %354, %v17
  %v356 = vpop.permute.xlu0 %355
  %vm358 = vcmp.ge.f32.partialorder %v14, %v352
  %vm359 = vcmp.ge.f32.partialorder %v15, %v356
  %361 = vset.pattern.permute.xlu0 3
  %362 = vperm.xlu0 %361, %v348
  %v363 = vpop.permute.xlu0 %362
  %366 = vset.pattern.permute.xlu0 3
  %367 = vperm.xlu0 %366, %v349
  %v368 = vpop.permute.xlu0 %367
  %v370 = vsel %vm358, %v363, 0.0
  %v371 = vsel %vm359, %v368, 0.0
  %v372 = vadd.f32 %v370, 0.0
  %v373 = vadd.f32 %v371, 0.0
  %374 = vrot.lane.b32.xlu0 %v232, 127
  %v375 = vpop.permute.xlu0 %374
  %376 = vrot.lane.b32.xlu0 %v233, 127
  %v377 = vpop.permute.xlu0 %376
  %v380 = vmul.f32 %v242, %v375
  %v381 = vmul.f32 %v243, %v377
  %382 = vset.pattern.permute.xlu0 4
  %383 = vperm.xlu0 %382, %v16
  %v384 = vpop.permute.xlu0 %383
  %386 = vset.pattern.permute.xlu0 4
  %387 = vperm.xlu0 %386, %v17
  %v388 = vpop.permute.xlu0 %387
  %vm390 = vcmp.ge.f32.partialorder %v14, %v384
  %vm391 = vcmp.ge.f32.partialorder %v15, %v388
  %393 = vset.pattern.permute.xlu0 4
  %394 = vperm.xlu0 %393, %v380
  %v395 = vpop.permute.xlu0 %394
  %398 = vset.pattern.permute.xlu0 4
  %399 = vperm.xlu0 %398, %v381
  %v400 = vpop.permute.xlu0 %399
  %v402 = vsel %vm390, %v395, 0.0
  %v403 = vsel %vm391, %v400, 0.0
  %v404 = vadd.f32 %v276, %v402
  %v405 = vadd.f32 %v277, %v403
  %406 = vrot.lane.b32.xlu0 %v232, 1
  %v407 = vpop.permute.xlu0 %406
  %408 = vrot.lane.b32.xlu0 %v233, 1
  %v409 = vpop.permute.xlu0 %408
  %v412 = vmul.f32 %v242, %v407
  %v413 = vmul.f32 %v243, %v409
  %414 = vset.pattern.permute.xlu0 5
  %415 = vperm.xlu0 %414, %v16
  %v416 = vpop.permute.xlu0 %415
  %418 = vset.pattern.permute.xlu0 5
  %419 = vperm.xlu0 %418, %v17
  %v420 = vpop.permute.xlu0 %419
  %vm422 = vcmp.ge.f32.partialorder %v14, %v416
  %vm423 = vcmp.ge.f32.partialorder %v15, %v420
  %425 = vset.pattern.permute.xlu0 5
  %426 = vperm.xlu0 %425, %v412
  %v427 = vpop.permute.xlu0 %426
  %430 = vset.pattern.permute.xlu0 5
  %431 = vperm.xlu0 %430, %v413
  %v432 = vpop.permute.xlu0 %431
  %v434 = vsel %vm422, %v427, 0.0
  %v435 = vsel %vm423, %v432, 0.0
  %v436 = vadd.f32 %v308, %v434
  %v437 = vadd.f32 %v309, %v435
  %438 = vrot.lane.b32.xlu0 %v232, 3
  %v439 = vpop.permute.xlu0 %438
  %440 = vrot.lane.b32.xlu0 %v233, 3
  %v441 = vpop.permute.xlu0 %440
  %v444 = vmul.f32 %v242, %v439
  %v445 = vmul.f32 %v243, %v441
  %446 = vset.pattern.permute.xlu0 6
  %447 = vperm.xlu0 %446, %v16
  %v448 = vpop.permute.xlu0 %447
  %450 = vset.pattern.permute.xlu0 6
  %451 = vperm.xlu0 %450, %v17
  %v452 = vpop.permute.xlu0 %451
  %vm454 = vcmp.ge.f32.partialorder %v14, %v448
  %vm455 = vcmp.ge.f32.partialorder %v15, %v452
  %457 = vset.pattern.permute.xlu0 6
  %458 = vperm.xlu0 %457, %v444
  %v459 = vpop.permute.xlu0 %458
  %462 = vset.pattern.permute.xlu0 6
  %463 = vperm.xlu0 %462, %v445
  %v464 = vpop.permute.xlu0 %463
  %v466 = vsel %vm454, %v459, 0.0
  %v467 = vsel %vm455, %v464, 0.0
  %v468 = vadd.f32 %v340, %v466
  %v469 = vadd.f32 %v341, %v467
  %470 = vrot.lane.b32.xlu0 %v232, 5
  %v471 = vpop.permute.xlu0 %470
  %472 = vrot.lane.b32.xlu0 %v233, 5
  %v473 = vpop.permute.xlu0 %472
  %v476 = vmul.f32 %v242, %v471
  %v477 = vmul.f32 %v243, %v473
  %478 = vset.pattern.permute.xlu0 7
  %479 = vperm.xlu0 %478, %v16
  %v480 = vpop.permute.xlu0 %479
  %482 = vset.pattern.permute.xlu0 7
  %483 = vperm.xlu0 %482, %v17
  %v484 = vpop.permute.xlu0 %483
  %vm486 = vcmp.ge.f32.partialorder %v14, %v480
  %vm487 = vcmp.ge.f32.partialorder %v15, %v484
  %489 = vset.pattern.permute.xlu0 7
  %490 = vperm.xlu0 %489, %v476
  %v491 = vpop.permute.xlu0 %490
  %494 = vset.pattern.permute.xlu0 7
  %495 = vperm.xlu0 %494, %v477
  %v496 = vpop.permute.xlu0 %495
  %v498 = vsel %vm486, %v491, 0.0
  %v499 = vsel %vm487, %v496, 0.0
  %v500 = vadd.f32 %v372, %v498
  %v501 = vadd.f32 %v373, %v499
  %502 = vrot.lane.b32.xlu0 %v232, 7
  %v503 = vpop.permute.xlu0 %502
  %504 = vrot.lane.b32.xlu0 %v233, 7
  %v505 = vpop.permute.xlu0 %504
  %v508 = vmul.f32 %v242, %v503
  %v509 = vmul.f32 %v243, %v505
  %510 = vset.pattern.permute.xlu0 8
  %511 = vperm.xlu0 %510, %v16
  %v512 = vpop.permute.xlu0 %511
  %514 = vset.pattern.permute.xlu0 8
  %515 = vperm.xlu0 %514, %v17
  %v516 = vpop.permute.xlu0 %515
  %vm518 = vcmp.ge.f32.partialorder %v14, %v512
  %vm519 = vcmp.ge.f32.partialorder %v15, %v516
  %521 = vset.pattern.permute.xlu0 8
  %522 = vperm.xlu0 %521, %v508
  %v523 = vpop.permute.xlu0 %522
  %526 = vset.pattern.permute.xlu0 8
  %527 = vperm.xlu0 %526, %v509
  %v528 = vpop.permute.xlu0 %527
  %v530 = vsel %vm518, %v523, 0.0
  %v531 = vsel %vm519, %v528, 0.0
  %v532 = vadd.f32 %v404, %v530
  %v533 = vadd.f32 %v405, %v531
  %v534 = vadd.f32 %v532, %v436
  %v535 = vadd.f32 %v533, %v437
  %v536 = vadd.f32 %v468, %v500
  %v537 = vadd.f32 %v469, %v501
  %v538 = vadd.f32 %v534, %v536
  %v539 = vadd.f32 %v535, %v537
  %540 = vst.msk [vmem:[%s3] sm:$0xff] %vm28, %v538
  %541 = vst.msk [vmem:[%s3 + $0x8] sm:$0xff] %vm28, %v539
  // Predicated region
  $region14: #{order_preserving_forward.1} parent=0 // pred_check
    _
  $region15: #{order_preserving_forward.1} parent=0 // pred_check_branch
    %543 = sbr.rel (0) target = $region17
  $region16: #{order_preserving_forward.1} parent=0 // pred_region
    _
  $region17: #{order_preserving_forward.1} parent=0 // pred_fallthru
    _
  // Predicated region
  $region18: #{order_preserving_forward.1} parent=0 // pred_check
    _
  $region19: #{order_preserving_forward.1} parent=0 // pred_check_branch
    %545 = sbr.rel (0) target = $region21
  $region20: #{order_preserving_forward.1} parent=0 // pred_region
    _
  $region21: #{order_preserving_forward.1} parent=0 // pred_fallthru
    _

</llo_original>
